<compile_context>
chip_gen: v7x
topology: tpu7x:2x2x1
jax: 0.10.0
libtpu: 0.0.40
codegen_flags: <defaults>
</compile_context>

<pallas_src>
import functools

import jax
import jax.numpy as jnp
from jax.experimental import pallas as pl
from jax.experimental.pallas import tpu as pltpu


def regression_kernel(ids_ref, emb_ref, wf_ref, bf_ref, out_ref,
                      acc_ref, first_ref, *,
                      V, K, PAD, T_TILE, NT, NOUT_PAD):
    ti = pl.program_id(1)

    # ---- one-hot MXU gather from the VMEM-resident bf16 table -------------
    ids_col = ids_ref[0]                                     # (T_TILE, 1) int32
    iota_v = jax.lax.broadcasted_iota(jnp.int32, (T_TILE, V), 1)
    # bool -> f32 -> bf16 (guaranteed-lowerable casts); values are exact 0/1,
    # so the gather matmul reproduces the bf16 table rows exactly (f32 accum).
    onehot = (ids_col == iota_v).astype(jnp.float32).astype(jnp.bfloat16)
    x_tile = jnp.dot(onehot, emb_ref[...],
                     preferred_element_type=jnp.float32)     # (T_TILE, E) f32

    # ---- running time-sum (conv & mean are linear: reduce over time first) -
    @pl.when(ti == 0)
    def _():
        acc_ref[...] = jnp.zeros_like(acc_ref)
        if PAD:
            first_ref[...] = x_tile[0:PAD, :]                # rows e_0..e_{PAD-1}

    acc_ref[...] += jnp.sum(x_tile, axis=0, keepdims=True)   # (1, E)

    # ---- finalize: per-tap edge corrections, fused matmul, sigmoid --------
    @pl.when(ti == NT - 1)
    def _():
        S = acc_ref[...]                                     # (1, E) = sum_t e_t
        pieces = []
        for k in range(K):
            d = k - PAD                                      # tap offset
            if d == 0:
                pieces.append(S)
            elif d > 0:
                # this tap never sees the first d positions
                corr = first_ref[0:1, :]
                for j in range(1, d):
                    corr = corr + first_ref[j:j + 1, :]
                pieces.append(S - corr)
            else:
                # this tap never sees the last |d| positions (rows of this,
                # the last, tile)
                corr = x_tile[T_TILE - 1:T_TILE, :]
                for j in range(2, -d + 1):
                    corr = corr + x_tile[T_TILE - j:T_TILE - j + 1, :]
                pieces.append(S - corr)
        xrow = jnp.concatenate(pieces, axis=1)               # (1, K*E) f32
        z = jnp.dot(xrow, wf_ref[...],
                    preferred_element_type=jnp.float32) + bf_ref[...]
        out_ref[...] = jax.nn.sigmoid(z).reshape(1, 1, NOUT_PAD)


def regression_forward(x_ids, lens, emb, conv_w, conv_b, lin_w, lin_b,
                       *, t_tile=128):
    """REGRESSION.forward (cnn + mot config).  Returns (scores, perm_idx)."""
    B, T = x_ids.shape
    V, E = emb.shape
    K, _, C = conv_w.shape                  # conv_w = torch (C,E,K).permute(2,1,0)
    NOUT = lin_w.shape[1]
    PAD = (K - 1) // 2
    assert K % 2 == 1, "odd cnn_window_size assumed (torch 'same' padding)"
    assert T % t_tile == 0, "T must be a multiple of the time tile"
    assert t_tile % 8 == 0
    NT = T // t_tile
    NOUT_PAD = 128                          # lane-dense output store

    # lens.sort(0, descending=True); x = x[perm_idx]   (host-side glue)
    # NOTE: tie-breaking of equal lengths may differ from torch.sort.
    perm_idx = jnp.argsort(-lens)
    x_sorted = x_ids[perm_idx].astype(jnp.int32).reshape(B, T, 1)

    # bf16 embedding table, VMEM-resident inside the kernel.
    emb_bf16 = emb.astype(jnp.bfloat16)

    # Fold conv (k-major (K*E, C)), MeanOverTime's 1/T, conv bias and the
    # final linear layer into one (K*E, NOUT) weight + (NOUT,) bias:
    #   z = (1/T) (sum_k s_k @ W_k) @ lin_w + conv_b @ lin_w + lin_b
    hi = jax.lax.Precision.HIGHEST
    wcat = conv_w.astype(jnp.float32).reshape(K * E, C)
    w_fused = jnp.dot(wcat, lin_w.astype(jnp.float32) / T, precision=hi)
    b_fused = (jnp.dot(conv_b.astype(jnp.float32), lin_w.astype(jnp.float32),
                       precision=hi)
               + lin_b.astype(jnp.float32))
    w_pad = jnp.zeros((K * E, NOUT_PAD), jnp.float32).at[:, :NOUT].set(w_fused)
    b_pad = jnp.zeros((1, NOUT_PAD), jnp.float32).at[0, :NOUT].set(b_fused)

    kernel = functools.partial(
        regression_kernel, V=V, K=K, PAD=PAD,
        T_TILE=t_tile, NT=NT, NOUT_PAD=NOUT_PAD)

    out = pl.pallas_call(
        kernel,
        out_shape=jax.ShapeDtypeStruct((B, 1, NOUT_PAD), jnp.float32),
        grid_spec=pltpu.PrefetchScalarGridSpec(
            num_scalar_prefetch=0,
            grid=(B, NT),
            in_specs=[
                pl.BlockSpec((1, t_tile, 1), lambda b, t: (b, t, 0)),   # ids
                pl.BlockSpec((V, E), lambda b, t: (0, 0)),              # emb (VMEM)
                pl.BlockSpec((K * E, NOUT_PAD), lambda b, t: (0, 0)),   # fused W
                pl.BlockSpec((1, NOUT_PAD), lambda b, t: (0, 0)),       # fused b
            ],
            out_specs=pl.BlockSpec((1, 1, NOUT_PAD),
                                   lambda b, t: (b, 0, 0)),
            scratch_shapes=[
                pltpu.VMEM((1, E), jnp.float32),              # running time-sum
                pltpu.VMEM((max(PAD, 1), E), jnp.float32),    # first PAD rows
            ]),
        compiler_params=pltpu.CompilerParams(
            dimension_semantics=("parallel", "arbitrary")),
    )(x_sorted, emb_bf16, w_pad, b_pad)

    return out[:, 0, :NOUT], perm_idx


def regression_reference(x_ids, lens, emb, conv_w, conv_b, lin_w, lin_b):
    """Plain-JAX f32 reference for correctness checking."""
    hi = jax.lax.Precision.HIGHEST
    perm_idx = jnp.argsort(-lens)
    x = emb[x_ids[perm_idx]]                                  # (B, T, E)
    B, T, E = x.shape
    K, _, C = conv_w.shape
    pad = (K - 1) // 2
    xp = jnp.pad(x, ((0, 0), (pad, pad), (0, 0)))
    y = conv_b[None, None, :].astype(jnp.float32)
    for k in range(K):
        y = y + jnp.einsum('bte,ec->btc', xp[:, k:k + T, :], conv_w[k],
                           precision=hi)
    m = jnp.mean(y, axis=1)
    z = jnp.dot(m, lin_w, precision=hi) + lin_b[None, :]
    return jax.nn.sigmoid(z), perm_idx


if __name__ == "__main__":
    B, T, V, E, C, K, NOUT = 2, 256, 512, 32, 32, 3, 1

    key = jax.random.PRNGKey(0)
    k_ids, k_len, k_emb, k_cw, k_cb, k_lw, k_lb = jax.random.split(key, 7)

    x_ids = jax.random.randint(k_ids, (B, T), 0, V, dtype=jnp.int32)
    lens = jax.random.randint(k_len, (B,), 1, T + 1, dtype=jnp.int32)

    emb    = jax.random.normal(k_emb, (V, E), jnp.float32) * 0.1
    conv_w = jax.random.normal(k_cw, (K, E, C), jnp.float32) * 0.1
    conv_b = jax.random.normal(k_cb, (C,), jnp.float32) * 0.1
    lin_w  = jax.random.normal(k_lw, (C, NOUT), jnp.float32) * 0.1
    lin_b  = jax.random.normal(k_lb, (NOUT,), jnp.float32) * 0.1

    out, perm_idx = regression_forward(x_ids, lens, emb, conv_w, conv_b,
                                       lin_w, lin_b)
    out = jax.block_until_ready(out)

    # Tight check against the kernel's precision policy: only the embedding
    # table is bf16-quantized; all other math is f32.
    emb_q = emb.astype(jnp.bfloat16).astype(jnp.float32)
    ref_q, ref_perm = regression_reference(x_ids, lens, emb_q, conv_w, conv_b,
                                           lin_w, lin_b)
    # Loose sanity check against the pure-f32 module math.
    ref_f32, _ = regression_reference(x_ids, lens, emb, conv_w, conv_b,
                                      lin_w, lin_b)

    assert out.shape == (B, NOUT)
    assert bool(jnp.all(perm_idx == ref_perm))
    assert bool(jnp.allclose(out, ref_q, rtol=2e-3, atol=2e-4)), \
        float(jnp.max(jnp.abs(out - ref_q)))
    assert bool(jnp.allclose(out, ref_f32, rtol=5e-2, atol=1e-2))

    print("KERNEL_OK")
</pallas_src>

<mosaic_0001>
module attributes {stable_mosaic.version = 11 : i64} {
  func.func @regression_kernel(%arg0: i32, %arg1: i32, %arg2: memref<1x128x1xi32, #tpu.memory_space<vmem>>, %arg3: memref<512x32xbf16, #tpu.memory_space<vmem>>, %arg4: memref<96x128xf32, #tpu.memory_space<vmem>>, %arg5: memref<1x128xf32, #tpu.memory_space<vmem>>, %arg6: memref<1x1x128xf32, #tpu.memory_space<vmem>>, %arg7: memref<1x32xf32, #tpu.memory_space<vmem>>, %arg8: memref<1x32xf32, #tpu.memory_space<vmem>>) attributes {dimension_semantics = [#tpu.dimension_semantics<parallel>, #tpu.dimension_semantics<arbitrary>], iteration_bounds = array<i64: 2, 2>, scalar_prefetch = 0 : i64, scratch_operands = 2 : i64, tpu.core_type = #tpu.core_type<tc>, window_params = [{transform_indices = @transform_0, window_bounds = array<i64: 1, 128, 1>}, {pipeline_mode = #tpu.pipeline_mode<synchronous>, transform_indices = @transform_1, window_bounds = array<i64: 512, 32>}, {pipeline_mode = #tpu.pipeline_mode<synchronous>, transform_indices = @transform_2, window_bounds = array<i64: 96, 128>}, {pipeline_mode = #tpu.pipeline_mode<synchronous>, transform_indices = @transform_3, window_bounds = array<i64: 1, 128>}, {transform_indices = @transform_4, window_bounds = array<i64: 1, 1, 128>}]} {
    %c0 = arith.constant 0 : index
    %c0_0 = arith.constant 0 : index
    %c0_1 = arith.constant 0 : index
    %0 = vector.load %arg2[%c0, %c0_0, %c0_1] : memref<1x128x1xi32, #tpu.memory_space<vmem>>, vector<1x128x1xi32>
    %1 = vector.shape_cast %0 : vector<1x128x1xi32> to vector<128x1xi32>
    %2 = tpu.iota {dimensions = array<i32: 1>} : vector<128x512xi32>
    %3 = vector.broadcast %1 : vector<128x1xi32> to vector<128x512xi32>
    %4 = arith.cmpi eq, %3, %2 : vector<128x512xi32>
    %5 = arith.extui %4 : vector<128x512xi1> to vector<128x512xi32>
    %6 = arith.sitofp %5 : vector<128x512xi32> to vector<128x512xf32>
    %7 = arith.truncf %6 : vector<128x512xf32> to vector<128x512xbf16>
    %c0_2 = arith.constant 0 : index
    %c0_3 = arith.constant 0 : index
    %8 = vector.load %arg3[%c0_2, %c0_3] : memref<512x32xbf16, #tpu.memory_space<vmem>>, vector<512x32xbf16>
    %cst = arith.constant dense<0.000000e+00> : vector<128x32xf32>
    %9 = tpu.matmul %7, %8, %cst {dimension_numbers = #tpu.dot_dimension_numbers<[1], [0], [0], [1], [0, 0, 1, 1], [], []>} : vector<128x512xbf16>, vector<512x32xbf16>, vector<128x32xf32> -> vector<128x32xf32>
    %c0_i32 = arith.constant 0 : i32
    %10 = arith.cmpi eq, %arg1, %c0_i32 : i32
    %11 = arith.extui %10 : i1 to i32
    %c0_i32_4 = arith.constant 0 : i32
    %12 = arith.cmpi ne, %11, %c0_i32_4 : i32
    scf.if %12 {
      %cst_11 = arith.constant 0.000000e+00 : f32
      %21 = vector.broadcast %cst_11 : f32 to vector<1x32xf32>
      %c0_12 = arith.constant 0 : index
      %c0_13 = arith.constant 0 : index
      %22 = vector.load %arg7[%c0_12, %c0_13] : memref<1x32xf32, #tpu.memory_space<vmem>>, vector<1x32xf32>
      tpu.vector_store %arg7[%c0_12, %c0_13], %21 {strides = array<i32>} : memref<1x32xf32, #tpu.memory_space<vmem>>, vector<1x32xf32>,
      %23 = vector.extract_strided_slice %9 {offsets = [0, 0], sizes = [1, 32], strides = [1, 1]} : vector<128x32xf32> to vector<1x32xf32>
      %c0_14 = arith.constant 0 : index
      %c0_15 = arith.constant 0 : index
      %24 = vector.load %arg8[%c0_14, %c0_15] : memref<1x32xf32, #tpu.memory_space<vmem>>, vector<1x32xf32>
      tpu.vector_store %arg8[%c0_14, %c0_15], %23 {strides = array<i32>} : memref<1x32xf32, #tpu.memory_space<vmem>>, vector<1x32xf32>,
    } else {
    }
    %c0_5 = arith.constant 0 : index
    %c0_6 = arith.constant 0 : index
    %13 = vector.load %arg7[%c0_5, %c0_6] : memref<1x32xf32, #tpu.memory_space<vmem>>, vector<1x32xf32>
    %cst_7 = arith.constant dense<0.000000e+00> : vector<32xf32>
    %14 = vector.multi_reduction <add>, %9, %cst_7 [0] : vector<128x32xf32> to vector<32xf32>
    %15 = vector.shape_cast %14 : vector<32xf32> to vector<1x32xf32>
    %16 = arith.addf %13, %15 : vector<1x32xf32>
    %c0_8 = arith.constant 0 : index
    %c0_9 = arith.constant 0 : index
    %17 = vector.load %arg7[%c0_8, %c0_9] : memref<1x32xf32, #tpu.memory_space<vmem>>, vector<1x32xf32>
    tpu.vector_store %arg7[%c0_8, %c0_9], %16 {strides = array<i32>} : memref<1x32xf32, #tpu.memory_space<vmem>>, vector<1x32xf32>,
    %c1_i32 = arith.constant 1 : i32
    %18 = arith.cmpi eq, %arg1, %c1_i32 : i32
    %19 = arith.extui %18 : i1 to i32
    %c0_i32_10 = arith.constant 0 : i32
    %20 = arith.cmpi ne, %19, %c0_i32_10 : i32
    scf.if %20 {
      %c0_11 = arith.constant 0 : index
      %c0_12 = arith.constant 0 : index
      %21 = vector.load %arg7[%c0_11, %c0_12] : memref<1x32xf32, #tpu.memory_space<vmem>>, vector<1x32xf32>
      %22 = vector.extract_strided_slice %9 {offsets = [127, 0], sizes = [1, 32], strides = [1, 1]} : vector<128x32xf32> to vector<1x32xf32>
      %23 = arith.subf %21, %22 : vector<1x32xf32>
      %c0_13 = arith.constant 0 : index
      %c0_14 = arith.constant 0 : index
      %24 = vector.load %arg8[%c0_13, %c0_14] : memref<1x32xf32, #tpu.memory_space<vmem>>, vector<1x32xf32>
      %25 = arith.subf %21, %24 : vector<1x32xf32>
      %26 = tpu.concatenate %23, %21, %25 in 1 : vector<1x32xf32>, vector<1x32xf32>, vector<1x32xf32> -> vector<1x96xf32>
      %c0_15 = arith.constant 0 : index
      %c0_16 = arith.constant 0 : index
      %27 = vector.load %arg4[%c0_15, %c0_16] : memref<96x128xf32, #tpu.memory_space<vmem>>, vector<96x128xf32>
      %cst_17 = arith.constant dense<0.000000e+00> : vector<1x128xf32>
      %28 = tpu.matmul %26, %27, %cst_17 {dimension_numbers = #tpu.dot_dimension_numbers<[1], [0], [0], [1], [0, 0, 1, 1], [], []>} : vector<1x96xf32>, vector<96x128xf32>, vector<1x128xf32> -> vector<1x128xf32>
      %c0_18 = arith.constant 0 : index
      %c0_19 = arith.constant 0 : index
      %29 = vector.load %arg5[%c0_18, %c0_19] : memref<1x128xf32, #tpu.memory_space<vmem>>, vector<1x128xf32>
      %30 = arith.addf %28, %29 : vector<1x128xf32>
      %31 = arith.negf %30 : vector<1x128xf32>
      %32 = math.exp %31 : vector<1x128xf32>
      %cst_20 = arith.constant 1.000000e+00 : f32
      %33 = vector.broadcast %cst_20 : f32 to vector<1x128xf32>
      %34 = arith.addf %33, %32 : vector<1x128xf32>
      %35 = arith.divf %33, %34 : vector<1x128xf32>
      %36 = vector.shape_cast %35 : vector<1x128xf32> to vector<1x1x128xf32>
      %c0_21 = arith.constant 0 : index
      %c0_22 = arith.constant 0 : index
      %c0_23 = arith.constant 0 : index
      %37 = vector.load %arg6[%c0_21, %c0_22, %c0_23] : memref<1x1x128xf32, #tpu.memory_space<vmem>>, vector<1x1x128xf32>
      tpu.vector_store %arg6[%c0_21, %c0_22, %c0_23], %36 {strides = array<i32>} : memref<1x1x128xf32, #tpu.memory_space<vmem>>, vector<1x1x128xf32>,
    } else {
    }
    return
  }
  func.func @transform_0(%arg0: i32, %arg1: i32) -> (i32, i32, i32) {
    %c0_i32 = arith.constant 0 : i32
    %c0_i32_0 = arith.constant 0 : i32
    return %arg0, %arg1, %c0_i32 : i32, i32, i32
  }
  func.func @transform_1(%arg0: i32, %arg1: i32) -> (i32, i32) {
    %c0_i32 = arith.constant 0 : i32
    %c0_i32_0 = arith.constant 0 : i32
    %c0_i32_1 = arith.constant 0 : i32
    return %c0_i32, %c0_i32_0 : i32, i32
  }
  func.func @transform_2(%arg0: i32, %arg1: i32) -> (i32, i32) {
    %c0_i32 = arith.constant 0 : i32
    %c0_i32_0 = arith.constant 0 : i32
    %c0_i32_1 = arith.constant 0 : i32
    return %c0_i32, %c0_i32_0 : i32, i32
  }
  func.func @transform_3(%arg0: i32, %arg1: i32) -> (i32, i32) {
    %c0_i32 = arith.constant 0 : i32
    %c0_i32_0 = arith.constant 0 : i32
    %c0_i32_1 = arith.constant 0 : i32
    return %c0_i32, %c0_i32_0 : i32, i32
  }
  func.func @transform_4(%arg0: i32, %arg1: i32) -> (i32, i32, i32) {
    %c0_i32 = arith.constant 0 : i32
    %c0_i32_0 = arith.constant 0 : i32
    %c0_i32_1 = arith.constant 0 : i32
    return %arg0, %c0_i32, %c0_i32_0 : i32, i32, i32
  }
}

</mosaic_0001>

<llo_original>
// kernel: tpu_custom_call.1
$region0: #{tpu_custom_call.1}
  #allocation0 [shape = 'u32[]', space=smem, size = 0x4, offset = 0x4, fixed_abs, tag = 'smem constant byte address 0x4 - core index']
  #allocation1 [shape = 'u32[144,128]{1,0:T(1,128)}', space=vmem, size = 0x12000, scoped, tag = 'internal scratch']
  #allocation2 [shape = 'f32[1,32]{1,0:T(1,128)}', space=vmem, size = 0x200, scoped, tag = 'scratch operand']
  #allocation3 [shape = 'f32[1,32]{1,0:T(1,128)}', space=vmem, size = 0x200, scoped, tag = 'scratch operand']
  %s0 = inlined_call_operand.vmem [shape: s32[2,256,1], index: 0, kind: input, shape index: {}]
  %s1 = inlined_call_operand.vmem [shape: bf16[512,32], index: 1, kind: input, shape index: {}]
  %s2 = inlined_call_operand.vmem [shape: f32[96,128], index: 2, kind: input, shape index: {}]
  %s3 = inlined_call_operand.vmem [shape: f32[1,128], index: 3, kind: input, shape index: {}]
  %s4 = inlined_call_operand.hbm [shape: f32[2,1,128], index: 4, kind: output, shape index: {}]
  %s5 = sld [smem:[#allocation0]]
  $region57: #{tpu_custom_call.1} parent=0
    _
  %s7 = ssub.s32 1, %s5
  %s8 = scalar_select 0, %s7, %s5
  $region1: #{tpu_custom_call.1} parent=0
    #allocation4 [shape = 'u8[1024]{0}', space=vmem, size = 0x400, scoped, tag = 'output window, operand 0']
    #allocation5 [shape = 's32[2]{0}', space=sflag, size = 0x8, scoped, tag = 'scoped memory for tpu_custom_call.1']
    %9 = vsyncpa [#allocation5], 0
    %s10 = scalar_lea.sflag [#allocation5], 1
    %11 = vsyncpa %s10, 0
    loop: start=0, step=1, limit=6
    $region2: #{tpu_custom_call.1} parent=1 // loop_pre_header
      _
    $region3: #{tpu_custom_call.1} parent=1 // loop_header
      %s13 = sphi 0, %s17
      %p14 = scmp.ge.s32.totalorder %s13, 6
      %s20 = sphi 0, %s32
      %s21 = sphi 0, %s28
      %s22 = sphi 0, %s20
      %s23 = sphi 0, %s21
      %s24 = sphi 0, %s22
      %s25 = sphi 0, %s23
      %s37 = sphi 0, %s39
      %s40 = sphi 0, %s37
      %s41 = sphi 0, %s40
      %s57 = sphi 0, %s41
      %s61 = sphi 0, %s61
      %s63 = sphi 0, %s61
      %s64 = sphi 0, %s63
      %s78 = sphi 0, %s64
      %s82 = sphi 0, %s82
      %s84 = sphi 0, %s82
      %s85 = sphi 0, %s84
      %s99 = sphi 0, %s85
      %s103 = sphi 0, %s103
      %s105 = sphi 0, %s103
      %s106 = sphi 0, %s105
      %s120 = sphi 0, %s106
      %s126 = sphi 0, %s128
      %s129 = sphi 0, %s126
      %s130 = sphi 0, %s129
      %s146 = sphi 0, %s130
    $region4: #{tpu_custom_call.1} parent=1 // loop_header_branch
      %16 = sbr.rel (%p14) target = $region8
    $region5: #{tpu_custom_call.1} parent=1 // loop_body
      %s18 = ssub.s32 %s13, 1
      %s19 = ssub.s32 %s13, 2
      %s26 = sadd.s32 1, %s21
      %p27 = scmp.ge.s32.totalorder %s26, 2
      %s28 = scalar_select %p27, 0, %s26
      %s29 = sadd.s32 1, %s20
      %s30 = scalar_select %p27, %s29, %s20
      %p31 = scmp.ge.s32.totalorder %s30, 2
      %s32 = scalar_select %p31, 0, %s30
      %s33 = ssub.s32 %s20, %s32
      %s34 = ssub.s32 %s21, %s28
      %s35 = sor.u32 %s33, %s34
      %p36 = scmp.eq.s32.totalorder %s35, 0
      %s38 = sadd.s32 %s37, 1
      %s39 = scalar_select %p36, %s37, %s38
      %p42 = pneg %p36
      %p43 = scmp.eq.s32.totalorder %s13, 3
      %p44 = por %p42, %p43
      %p45 = scmp.ne.s32.totalorder %s37, %s40
      %p46 = scmp.eq.s32.totalorder %s13, 0
      %p47 = por %p45, %p46
      %p48 = scmp.ne.s32.totalorder %s37, %s40
      %p49 = scmp.eq.s32.totalorder %s18, 3
      %p50 = por %p48, %p49
      %p51 = scmp.ne.s32.totalorder %s40, %s41
      %p52 = scmp.eq.s32.totalorder %s18, 0
      %p53 = por %p51, %p52
      %p54 = scmp.ne.s32.totalorder %s40, %s41
      %p55 = scmp.eq.s32.totalorder %s19, 3
      %p56 = por %p54, %p55
      %p58 = scmp.ne.s32.totalorder %s41, %s57
      %p59 = scmp.eq.s32.totalorder %s19, 0
      %p60 = por %p58, %p59
      %s62 = sadd.s32 %s61, 1
      %p65 = scmp.eq.s32.totalorder %s13, 3
      %p66 = scmp.ne.s32.totalorder %s61, %s63
      %p67 = scmp.eq.s32.totalorder %s13, 0
      %p68 = por %p66, %p67
      %p69 = scmp.ne.s32.totalorder %s61, %s63
      %p70 = scmp.eq.s32.totalorder %s18, 3
      %p71 = por %p69, %p70
      %p72 = scmp.ne.s32.totalorder %s63, %s64
      %p73 = scmp.eq.s32.totalorder %s18, 0
      %p74 = por %p72, %p73
      %p75 = scmp.ne.s32.totalorder %s63, %s64
      %p76 = scmp.eq.s32.totalorder %s19, 3
      %p77 = por %p75, %p76
      %p79 = scmp.ne.s32.totalorder %s64, %s78
      %p80 = scmp.eq.s32.totalorder %s19, 0
      %p81 = por %p79, %p80
      %s83 = sadd.s32 %s82, 1
      %p86 = scmp.eq.s32.totalorder %s13, 3
      %p87 = scmp.ne.s32.totalorder %s82, %s84
      %p88 = scmp.eq.s32.totalorder %s13, 0
      %p89 = por %p87, %p88
      %p90 = scmp.ne.s32.totalorder %s82, %s84
      %p91 = scmp.eq.s32.totalorder %s18, 3
      %p92 = por %p90, %p91
      %p93 = scmp.ne.s32.totalorder %s84, %s85
      %p94 = scmp.eq.s32.totalorder %s18, 0
      %p95 = por %p93, %p94
      %p96 = scmp.ne.s32.totalorder %s84, %s85
      %p97 = scmp.eq.s32.totalorder %s19, 3
      %p98 = por %p96, %p97
      %p100 = scmp.ne.s32.totalorder %s85, %s99
      %p101 = scmp.eq.s32.totalorder %s19, 0
      %p102 = por %p100, %p101
      %s104 = sadd.s32 %s103, 1
      %p107 = scmp.eq.s32.totalorder %s13, 3
      %p108 = scmp.ne.s32.totalorder %s103, %s105
      %p109 = scmp.eq.s32.totalorder %s13, 0
      %p110 = por %p108, %p109
      %p111 = scmp.ne.s32.totalorder %s103, %s105
      %p112 = scmp.eq.s32.totalorder %s18, 3
      %p113 = por %p111, %p112
      %p114 = scmp.ne.s32.totalorder %s105, %s106
      %p115 = scmp.eq.s32.totalorder %s18, 0
      %p116 = por %p114, %p115
      %p117 = scmp.ne.s32.totalorder %s105, %s106
      %p118 = scmp.eq.s32.totalorder %s19, 3
      %p119 = por %p117, %p118
      %p121 = scmp.ne.s32.totalorder %s106, %s120
      %p122 = scmp.eq.s32.totalorder %s19, 0
      %p123 = por %p121, %p122
      %s124 = ssub.s32 %s20, %s32
      %p125 = scmp.eq.s32.totalorder %s124, 0
      %s127 = sadd.s32 %s126, 1
      %s128 = scalar_select %p125, %s126, %s127
      %p131 = pneg %p125
      %p132 = scmp.eq.s32.totalorder %s13, 3
      %p133 = por %p131, %p132
      %p134 = scmp.ne.s32.totalorder %s126, %s129
      %p135 = scmp.eq.s32.totalorder %s13, 0
      %p136 = por %p134, %p135
      %p137 = scmp.ne.s32.totalorder %s126, %s129
      %p138 = scmp.eq.s32.totalorder %s18, 3
      %p139 = por %p137, %p138
      %p140 = scmp.ne.s32.totalorder %s129, %s130
      %p141 = scmp.eq.s32.totalorder %s18, 0
      %p142 = por %p140, %p141
      %p143 = scmp.ne.s32.totalorder %s129, %s130
      %p144 = scmp.eq.s32.totalorder %s19, 3
      %p145 = por %p143, %p144
      %p147 = scmp.ne.s32.totalorder %s130, %s146
      %p148 = scmp.eq.s32.totalorder %s19, 0
      %p149 = por %p147, %p148
      %p150 = scmp.le.s32.totalorder 1, %s13
      %p151 = scmp.lt.s32.totalorder %s13, 5
      %p152 = pnand %p150, %p151
      %p153 = pneg %p152
      // Predicated region
      $region9: #{tpu_custom_call.1} parent=5 // pred_check
        _
      $region10: #{tpu_custom_call.1} parent=5 // pred_check_branch
        %155 = sbr.rel (%p152) target = $region12
      $region11: #{tpu_custom_call.1} parent=5 // pred_region
        %s156 = ssub.s32 %s13, 1
        // Predicated region
        $region13: #{tpu_custom_call.1} parent=11 // pred_check
          %p157 = pneg %p74
        $region14: #{tpu_custom_call.1} parent=11 // pred_check_branch
          %159 = sbr.rel (%p157) target = $region16
        $region15: #{tpu_custom_call.1} parent=11 // pred_region
          _
        $region16: #{tpu_custom_call.1} parent=11 // pred_fallthru
          _
        // Predicated region
        $region17: #{tpu_custom_call.1} parent=11 // pred_check
          %p160 = pneg %p95
        $region18: #{tpu_custom_call.1} parent=11 // pred_check_branch
          %162 = sbr.rel (%p160) target = $region20
        $region19: #{tpu_custom_call.1} parent=11 // pred_region
          _
        $region20: #{tpu_custom_call.1} parent=11 // pred_fallthru
          _
        // Predicated region
        $region21: #{tpu_custom_call.1} parent=11 // pred_check
          %p163 = pneg %p116
        $region22: #{tpu_custom_call.1} parent=11 // pred_check_branch
          %165 = sbr.rel (%p163) target = $region24
        $region23: #{tpu_custom_call.1} parent=11 // pred_region
          _
        $region24: #{tpu_custom_call.1} parent=11 // pred_fallthru
          _
      $region12: #{tpu_custom_call.1} parent=5 // pred_fallthru
        _
      %p166 = scmp.lt.s32.totalorder %s13, 4
      // Predicated region
      $region25: #{tpu_custom_call.1} parent=5 // pred_check
        %p167 = pneg %p166
      $region26: #{tpu_custom_call.1} parent=5 // pred_check_branch
        %169 = sbr.rel (%p167) target = $region28
      $region27: #{tpu_custom_call.1} parent=5 // pred_region
        // Predicated region
        $region29: #{tpu_custom_call.1} parent=27 // pred_check
          %p170 = pneg %p47
        $region30: #{tpu_custom_call.1} parent=27 // pred_check_branch
          %172 = sbr.rel (%p170) target = $region32
        $region31: #{tpu_custom_call.1} parent=27 // pred_region
          %s173 = smul.u32 16, %s21
          %p174 = scmp.lt.s32.totalorder %s20, 1
          %s175 = scalar_select %p174, %s20, 1
          %p176 = scmp.lt.s32.totalorder %s173, 31
          %s177 = scalar_select %p176, %s173, 31
          %s178 = smul.addr %s175, 32
          %s179 = sadd.s32 %s177, %s178
          %s180 = smul.addr %s179, 8
          %s181 = scalar_lea.vmem %s0, %s180
          %s182 = smul.u32 16, %s21
        $region32: #{tpu_custom_call.1} parent=27 // pred_fallthru
          _
      $region28: #{tpu_custom_call.1} parent=5 // pred_fallthru
        _
      %p183 = scmp.le.s32.totalorder 1, %s13
      %p184 = scmp.lt.s32.totalorder %s13, 5
      %p185 = pnand %p183, %p184
      %p186 = pneg %p185
      // Predicated region
      $region33: #{tpu_custom_call.1} parent=5 // pred_check
        _
      $region34: #{tpu_custom_call.1} parent=5 // pred_check_branch
        %188 = sbr.rel (%p185) target = $region36
      $region35: #{tpu_custom_call.1} parent=5 // pred_region
        %s189 = ssub.s32 %s13, 1
        %s190 = smul.u32 16, %s23
        %p191 = scmp.lt.s32.totalorder %s22, 1
        %s192 = scalar_select %p191, %s22, 1
        %p193 = scmp.lt.s32.totalorder %s190, 31
        %s194 = scalar_select %p193, %s190, 31
        %s195 = smul.addr %s192, 32
        %s196 = sadd.s32 %s194, %s195
        %s197 = smul.addr %s196, 8
        %s198 = scalar_lea.vmem %s0, %s197
        %p199 = pneg %p53
        %p200 = pneg %p50
        %p201 = pneg %p74
        %p202 = pneg %p71
        %p203 = pneg %p95
        %p204 = pneg %p92
        %p205 = pneg %p116
        %p206 = pneg %p113
        %p207 = pneg %p142
        %p208 = pneg %p139
        %s209 = sand.u32 %s129, 1
        %s210 = scalar_lea.sflag [#allocation5], %s209
        %s211 = sand.u32 %s129, 1
        %s212 = scalar_lea.vmem [#allocation4], %s211
        %s213 = smul.u32 16, %s23
        %p214 = scmp.lt.s32.totalorder %s22, 1
        %s215 = scalar_select %p214, %s22, 1
        %p216 = scmp.lt.s32.totalorder %s213, 31
        %s217 = scalar_select %p216, %s213, 31
        %s218 = smul.addr %s215, 32
        %s219 = sadd.s32 %s217, %s218
        %s220 = smul.addr %s219, 8
        %s221 = scalar_lea.vmem %s0, %s220
        %s222 = smul.u32 16, %s23
        %v224 = vld [vmem:[%s221] sm:$0xff]
        %v225 = vld [vmem:[%s221 + $0x8] sm:$0xff]
        %v226 = vld [vmem:[%s221 + $0x10] sm:$0xff]
        %v227 = vld [vmem:[%s221 + $0x18] sm:$0xff]
        %v228 = vld [vmem:[%s221 + $0x20] sm:$0xff]
        %v229 = vld [vmem:[%s221 + $0x28] sm:$0xff]
        %v230 = vld [vmem:[%s221 + $0x30] sm:$0xff]
        %v231 = vld [vmem:[%s221 + $0x38] sm:$0xff]
        %v232 = vld [vmem:[%s221 + $0x40] sm:$0xff]
        %v233 = vld [vmem:[%s221 + $0x48] sm:$0xff]
        %v234 = vld [vmem:[%s221 + $0x50] sm:$0xff]
        %v235 = vld [vmem:[%s221 + $0x58] sm:$0xff]
        %v236 = vld [vmem:[%s221 + $0x60] sm:$0xff]
        %v237 = vld [vmem:[%s221 + $0x68] sm:$0xff]
        %v238 = vld [vmem:[%s221 + $0x70] sm:$0xff]
        %v239 = vld [vmem:[%s221 + $0x78] sm:$0xff]
        %v240 = vlaneseq
        %v241 = vand.u32 %v240, 127
        %v242 = vadd.s32 %v241, 128
        %v243 = vadd.s32 %v241, 256
        %v244 = vadd.s32 %v241, 384
        %245 = vset.pattern.permute.xlu0 0
        %246 = vperm.xlu0 %245, %v224
        %v247 = vpop.permute.xlu0 %246
        %248 = vset.pattern.permute.xlu0 0
        %249 = vperm.xlu0 %248, %v225
        %v250 = vpop.permute.xlu0 %249
        %251 = vset.pattern.permute.xlu0 0
        %252 = vperm.xlu0 %251, %v226
        %v253 = vpop.permute.xlu0 %252
        %254 = vset.pattern.permute.xlu0 0
        %255 = vperm.xlu0 %254, %v227
        %v256 = vpop.permute.xlu0 %255
        %257 = vset.pattern.permute.xlu0 0
        %258 = vperm.xlu0 %257, %v228
        %v259 = vpop.permute.xlu0 %258
        %260 = vset.pattern.permute.xlu0 0
        %261 = vperm.xlu0 %260, %v229
        %v262 = vpop.permute.xlu0 %261
        %263 = vset.pattern.permute.xlu0 0
        %264 = vperm.xlu0 %263, %v230
        %v265 = vpop.permute.xlu0 %264
        %266 = vset.pattern.permute.xlu0 0
        %267 = vperm.xlu0 %266, %v231
        %v268 = vpop.permute.xlu0 %267
        %269 = vset.pattern.permute.xlu0 0
        %270 = vperm.xlu0 %269, %v232
        %v271 = vpop.permute.xlu0 %270
        %272 = vset.pattern.permute.xlu0 0
        %273 = vperm.xlu0 %272, %v233
        %v274 = vpop.permute.xlu0 %273
        %275 = vset.pattern.permute.xlu0 0
        %276 = vperm.xlu0 %275, %v234
        %v277 = vpop.permute.xlu0 %276
        %278 = vset.pattern.permute.xlu0 0
        %279 = vperm.xlu0 %278, %v235
        %v280 = vpop.permute.xlu0 %279
        %281 = vset.pattern.permute.xlu0 0
        %282 = vperm.xlu0 %281, %v236
        %v283 = vpop.permute.xlu0 %282
        %284 = vset.pattern.permute.xlu0 0
        %285 = vperm.xlu0 %284, %v237
        %v286 = vpop.permute.xlu0 %285
        %287 = vset.pattern.permute.xlu0 0
        %288 = vperm.xlu0 %287, %v238
        %v289 = vpop.permute.xlu0 %288
        %290 = vset.pattern.permute.xlu0 0
        %291 = vperm.xlu0 %290, %v239
        %v292 = vpop.permute.xlu0 %291
        %vm293 = vcmp.eq.s32.totalorder %v247, %v241
        %vm294 = vcmp.eq.s32.totalorder %v247, %v242
        %vm295 = vcmp.eq.s32.totalorder %v247, %v243
        %vm296 = vcmp.eq.s32.totalorder %v247, %v244
        %vm297 = vcmp.eq.s32.totalorder %v250, %v241
        %vm298 = vcmp.eq.s32.totalorder %v250, %v242
        %vm299 = vcmp.eq.s32.totalorder %v250, %v243
        %vm300 = vcmp.eq.s32.totalorder %v250, %v244
        %vm301 = vcmp.eq.s32.totalorder %v253, %v241
        %vm302 = vcmp.eq.s32.totalorder %v253, %v242
        %vm303 = vcmp.eq.s32.totalorder %v253, %v243
        %vm304 = vcmp.eq.s32.totalorder %v253, %v244
        %vm305 = vcmp.eq.s32.totalorder %v256, %v241
        %vm306 = vcmp.eq.s32.totalorder %v256, %v242
        %vm307 = vcmp.eq.s32.totalorder %v256, %v243
        %vm308 = vcmp.eq.s32.totalorder %v256, %v244
        %vm309 = vcmp.eq.s32.totalorder %v259, %v241
        %vm310 = vcmp.eq.s32.totalorder %v259, %v242
        %vm311 = vcmp.eq.s32.totalorder %v259, %v243
        %vm312 = vcmp.eq.s32.totalorder %v259, %v244
        %vm313 = vcmp.eq.s32.totalorder %v262, %v241
        %vm314 = vcmp.eq.s32.totalorder %v262, %v242
        %vm315 = vcmp.eq.s32.totalorder %v262, %v243
        %vm316 = vcmp.eq.s32.totalorder %v262, %v244
        %vm317 = vcmp.eq.s32.totalorder %v265, %v241
        %vm318 = vcmp.eq.s32.totalorder %v265, %v242
        %vm319 = vcmp.eq.s32.totalorder %v265, %v243
        %vm320 = vcmp.eq.s32.totalorder %v265, %v244
        %vm321 = vcmp.eq.s32.totalorder %v268, %v241
        %vm322 = vcmp.eq.s32.totalorder %v268, %v242
        %vm323 = vcmp.eq.s32.totalorder %v268, %v243
        %vm324 = vcmp.eq.s32.totalorder %v268, %v244
        %vm325 = vcmp.eq.s32.totalorder %v271, %v241
        %vm326 = vcmp.eq.s32.totalorder %v271, %v242
        %vm327 = vcmp.eq.s32.totalorder %v271, %v243
        %vm328 = vcmp.eq.s32.totalorder %v271, %v244
        %vm329 = vcmp.eq.s32.totalorder %v274, %v241
        %vm330 = vcmp.eq.s32.totalorder %v274, %v242
        %vm331 = vcmp.eq.s32.totalorder %v274, %v243
        %vm332 = vcmp.eq.s32.totalorder %v274, %v244
        %vm333 = vcmp.eq.s32.totalorder %v277, %v241
        %vm334 = vcmp.eq.s32.totalorder %v277, %v242
        %vm335 = vcmp.eq.s32.totalorder %v277, %v243
        %vm336 = vcmp.eq.s32.totalorder %v277, %v244
        %vm337 = vcmp.eq.s32.totalorder %v280, %v241
        %vm338 = vcmp.eq.s32.totalorder %v280, %v242
        %vm339 = vcmp.eq.s32.totalorder %v280, %v243
        %vm340 = vcmp.eq.s32.totalorder %v280, %v244
        %vm341 = vcmp.eq.s32.totalorder %v283, %v241
        %vm342 = vcmp.eq.s32.totalorder %v283, %v242
        %vm343 = vcmp.eq.s32.totalorder %v283, %v243
        %vm344 = vcmp.eq.s32.totalorder %v283, %v244
        %vm345 = vcmp.eq.s32.totalorder %v286, %v241
        %vm346 = vcmp.eq.s32.totalorder %v286, %v242
        %vm347 = vcmp.eq.s32.totalorder %v286, %v243
        %vm348 = vcmp.eq.s32.totalorder %v286, %v244
        %vm349 = vcmp.eq.s32.totalorder %v289, %v241
        %vm350 = vcmp.eq.s32.totalorder %v289, %v242
        %vm351 = vcmp.eq.s32.totalorder %v289, %v243
        %vm352 = vcmp.eq.s32.totalorder %v289, %v244
        %vm353 = vcmp.eq.s32.totalorder %v292, %v241
        %vm354 = vcmp.eq.s32.totalorder %v292, %v242
        %vm355 = vcmp.eq.s32.totalorder %v292, %v243
        %vm356 = vcmp.eq.s32.totalorder %v292, %v244
        %v357 = vsel %vm293, 1, 0
        %v358 = vsel %vm294, 1, 0
        %v359 = vsel %vm295, 1, 0
        %v360 = vsel %vm296, 1, 0
        %v361 = vsel %vm297, 1, 0
        %v362 = vsel %vm298, 1, 0
        %v363 = vsel %vm299, 1, 0
        %v364 = vsel %vm300, 1, 0
        %v365 = vsel %vm301, 1, 0
        %v366 = vsel %vm302, 1, 0
        %v367 = vsel %vm303, 1, 0
        %v368 = vsel %vm304, 1, 0
        %v369 = vsel %vm305, 1, 0
        %v370 = vsel %vm306, 1, 0
        %v371 = vsel %vm307, 1, 0
        %v372 = vsel %vm308, 1, 0
        %v373 = vsel %vm309, 1, 0
        %v374 = vsel %vm310, 1, 0
        %v375 = vsel %vm311, 1, 0
        %v376 = vsel %vm312, 1, 0
        %v377 = vsel %vm313, 1, 0
        %v378 = vsel %vm314, 1, 0
        %v379 = vsel %vm315, 1, 0
        %v380 = vsel %vm316, 1, 0
        %v381 = vsel %vm317, 1, 0
        %v382 = vsel %vm318, 1, 0
        %v383 = vsel %vm319, 1, 0
        %v384 = vsel %vm320, 1, 0
        %v385 = vsel %vm321, 1, 0
        %v386 = vsel %vm322, 1, 0
        %v387 = vsel %vm323, 1, 0
        %v388 = vsel %vm324, 1, 0
        %v389 = vsel %vm325, 1, 0
        %v390 = vsel %vm326, 1, 0
        %v391 = vsel %vm327, 1, 0
        %v392 = vsel %vm328, 1, 0
        %v393 = vsel %vm329, 1, 0
        %v394 = vsel %vm330, 1, 0
        %v395 = vsel %vm331, 1, 0
        %v396 = vsel %vm332, 1, 0
        %v397 = vsel %vm333, 1, 0
        %v398 = vsel %vm334, 1, 0
        %v399 = vsel %vm335, 1, 0
        %v400 = vsel %vm336, 1, 0
        %v401 = vsel %vm337, 1, 0
        %v402 = vsel %vm338, 1, 0
        %v403 = vsel %vm339, 1, 0
        %v404 = vsel %vm340, 1, 0
        %v405 = vsel %vm341, 1, 0
        %v406 = vsel %vm342, 1, 0
        %v407 = vsel %vm343, 1, 0
        %v408 = vsel %vm344, 1, 0
        %v409 = vsel %vm345, 1, 0
        %v410 = vsel %vm346, 1, 0
        %v411 = vsel %vm347, 1, 0
        %v412 = vsel %vm348, 1, 0
        %v413 = vsel %vm349, 1, 0
        %v414 = vsel %vm350, 1, 0
        %v415 = vsel %vm351, 1, 0
        %v416 = vsel %vm352, 1, 0
        %v417 = vsel %vm353, 1, 0
        %v418 = vsel %vm354, 1, 0
        %v419 = vsel %vm355, 1, 0
        %v420 = vsel %vm356, 1, 0
        %v421 = vcvt.s32.f32 %v357
        %v422 = vcvt.s32.f32 %v358
        %v423 = vcvt.s32.f32 %v359
        %v424 = vcvt.s32.f32 %v360
        %v425 = vcvt.s32.f32 %v361
        %v426 = vcvt.s32.f32 %v362
        %v427 = vcvt.s32.f32 %v363
        %v428 = vcvt.s32.f32 %v364
        %v429 = vcvt.s32.f32 %v365
        %v430 = vcvt.s32.f32 %v366
        %v431 = vcvt.s32.f32 %v367
        %v432 = vcvt.s32.f32 %v368
        %v433 = vcvt.s32.f32 %v369
        %v434 = vcvt.s32.f32 %v370
        %v435 = vcvt.s32.f32 %v371
        %v436 = vcvt.s32.f32 %v372
        %v437 = vcvt.s32.f32 %v373
        %v438 = vcvt.s32.f32 %v374
        %v439 = vcvt.s32.f32 %v375
        %v440 = vcvt.s32.f32 %v376
        %v441 = vcvt.s32.f32 %v377
        %v442 = vcvt.s32.f32 %v378
        %v443 = vcvt.s32.f32 %v379
        %v444 = vcvt.s32.f32 %v380
        %v445 = vcvt.s32.f32 %v381
        %v446 = vcvt.s32.f32 %v382
        %v447 = vcvt.s32.f32 %v383
        %v448 = vcvt.s32.f32 %v384
        %v449 = vcvt.s32.f32 %v385
        %v450 = vcvt.s32.f32 %v386
        %v451 = vcvt.s32.f32 %v387
        %v452 = vcvt.s32.f32 %v388
        %v453 = vcvt.s32.f32 %v389
        %v454 = vcvt.s32.f32 %v390
        %v455 = vcvt.s32.f32 %v391
        %v456 = vcvt.s32.f32 %v392
        %v457 = vcvt.s32.f32 %v393
        %v458 = vcvt.s32.f32 %v394
        %v459 = vcvt.s32.f32 %v395
        %v460 = vcvt.s32.f32 %v396
        %v461 = vcvt.s32.f32 %v397
        %v462 = vcvt.s32.f32 %v398
        %v463 = vcvt.s32.f32 %v399
        %v464 = vcvt.s32.f32 %v400
        %v465 = vcvt.s32.f32 %v401
        %v466 = vcvt.s32.f32 %v402
        %v467 = vcvt.s32.f32 %v403
        %v468 = vcvt.s32.f32 %v404
        %v469 = vcvt.s32.f32 %v405
        %v470 = vcvt.s32.f32 %v406
        %v471 = vcvt.s32.f32 %v407
        %v472 = vcvt.s32.f32 %v408
        %v473 = vcvt.s32.f32 %v409
        %v474 = vcvt.s32.f32 %v410
        %v475 = vcvt.s32.f32 %v411
        %v476 = vcvt.s32.f32 %v412
        %v477 = vcvt.s32.f32 %v413
        %v478 = vcvt.s32.f32 %v414
        %v479 = vcvt.s32.f32 %v415
        %v480 = vcvt.s32.f32 %v416
        %v481 = vcvt.s32.f32 %v417
        %v482 = vcvt.s32.f32 %v418
        %v483 = vcvt.s32.f32 %v419
        %v484 = vcvt.s32.f32 %v420
        %v485 = vpack.c.bf16 %v425, %v421
        %v486 = vpack.c.bf16 %v426, %v422
        %v487 = vpack.c.bf16 %v427, %v423
        %v488 = vpack.c.bf16 %v428, %v424
        %v489 = vpack.c.bf16 %v433, %v429
        %v490 = vpack.c.bf16 %v434, %v430
        %v491 = vpack.c.bf16 %v435, %v431
        %v492 = vpack.c.bf16 %v436, %v432
        %v493 = vpack.c.bf16 %v441, %v437
        %v494 = vpack.c.bf16 %v442, %v438
        %v495 = vpack.c.bf16 %v443, %v439
        %v496 = vpack.c.bf16 %v444, %v440
        %v497 = vpack.c.bf16 %v449, %v445
        %v498 = vpack.c.bf16 %v450, %v446
        %v499 = vpack.c.bf16 %v451, %v447
        %v500 = vpack.c.bf16 %v452, %v448
        %v501 = vpack.c.bf16 %v457, %v453
        %v502 = vpack.c.bf16 %v458, %v454
        %v503 = vpack.c.bf16 %v459, %v455
        %v504 = vpack.c.bf16 %v460, %v456
        %v505 = vpack.c.bf16 %v465, %v461
        %v506 = vpack.c.bf16 %v466, %v462
        %v507 = vpack.c.bf16 %v467, %v463
        %v508 = vpack.c.bf16 %v468, %v464
        %v509 = vpack.c.bf16 %v473, %v469
        %v510 = vpack.c.bf16 %v474, %v470
        %v511 = vpack.c.bf16 %v475, %v471
        %v512 = vpack.c.bf16 %v476, %v472
        %v513 = vpack.c.bf16 %v481, %v477
        %v514 = vpack.c.bf16 %v482, %v478
        %v515 = vpack.c.bf16 %v483, %v479
        %v516 = vpack.c.bf16 %v484, %v480
        %v517 = vld [vmem:[%s1] sm:$0xf]
        %v518 = vld [vmem:[%s1 + $0x4] sm:$0xf]
        %v519 = vld [vmem:[%s1 + $0x8] sm:$0xf]
        %v520 = vld [vmem:[%s1 + $0xc] sm:$0xf]
        %v521 = vld [vmem:[%s1 + $0x10] sm:$0xf]
        %v522 = vld [vmem:[%s1 + $0x14] sm:$0xf]
        %v523 = vld [vmem:[%s1 + $0x18] sm:$0xf]
        %v524 = vld [vmem:[%s1 + $0x1c] sm:$0xf]
        %v525 = vld [vmem:[%s1 + $0x20] sm:$0xf]
        %v526 = vld [vmem:[%s1 + $0x24] sm:$0xf]
        %v527 = vld [vmem:[%s1 + $0x28] sm:$0xf]
        %v528 = vld [vmem:[%s1 + $0x2c] sm:$0xf]
        %v529 = vld [vmem:[%s1 + $0x30] sm:$0xf]
        %v530 = vld [vmem:[%s1 + $0x34] sm:$0xf]
        %v531 = vld [vmem:[%s1 + $0x38] sm:$0xf]
        %v532 = vld [vmem:[%s1 + $0x3c] sm:$0xf]
        %v533 = vld [vmem:[%s1 + $0x40] sm:$0xf]
        %v534 = vld [vmem:[%s1 + $0x44] sm:$0xf]
        %v535 = vld [vmem:[%s1 + $0x48] sm:$0xf]
        %v536 = vld [vmem:[%s1 + $0x4c] sm:$0xf]
        %v537 = vld [vmem:[%s1 + $0x50] sm:$0xf]
        %v538 = vld [vmem:[%s1 + $0x54] sm:$0xf]
        %v539 = vld [vmem:[%s1 + $0x58] sm:$0xf]
        %v540 = vld [vmem:[%s1 + $0x5c] sm:$0xf]
        %v541 = vld [vmem:[%s1 + $0x60] sm:$0xf]
        %v542 = vld [vmem:[%s1 + $0x64] sm:$0xf]
        %v543 = vld [vmem:[%s1 + $0x68] sm:$0xf]
        %v544 = vld [vmem:[%s1 + $0x6c] sm:$0xf]
        %v545 = vld [vmem:[%s1 + $0x70] sm:$0xf]
        %v546 = vld [vmem:[%s1 + $0x74] sm:$0xf]
        %v547 = vld [vmem:[%s1 + $0x78] sm:$0xf]
        %v548 = vld [vmem:[%s1 + $0x7c] sm:$0xf]
        %v549 = vld [vmem:[%s1 + $0x80] sm:$0xf]
        %v550 = vld [vmem:[%s1 + $0x84] sm:$0xf]
        %v551 = vld [vmem:[%s1 + $0x88] sm:$0xf]
        %v552 = vld [vmem:[%s1 + $0x8c] sm:$0xf]
        %v553 = vld [vmem:[%s1 + $0x90] sm:$0xf]
        %v554 = vld [vmem:[%s1 + $0x94] sm:$0xf]
        %v555 = vld [vmem:[%s1 + $0x98] sm:$0xf]
        %v556 = vld [vmem:[%s1 + $0x9c] sm:$0xf]
        %v557 = vld [vmem:[%s1 + $0xa0] sm:$0xf]
        %v558 = vld [vmem:[%s1 + $0xa4] sm:$0xf]
        %v559 = vld [vmem:[%s1 + $0xa8] sm:$0xf]
        %v560 = vld [vmem:[%s1 + $0xac] sm:$0xf]
        %v561 = vld [vmem:[%s1 + $0xb0] sm:$0xf]
        %v562 = vld [vmem:[%s1 + $0xb4] sm:$0xf]
        %v563 = vld [vmem:[%s1 + $0xb8] sm:$0xf]
        %v564 = vld [vmem:[%s1 + $0xbc] sm:$0xf]
        %v565 = vld [vmem:[%s1 + $0xc0] sm:$0xf]
        %v566 = vld [vmem:[%s1 + $0xc4] sm:$0xf]
        %v567 = vld [vmem:[%s1 + $0xc8] sm:$0xf]
        %v568 = vld [vmem:[%s1 + $0xcc] sm:$0xf]
        %v569 = vld [vmem:[%s1 + $0xd0] sm:$0xf]
        %v570 = vld [vmem:[%s1 + $0xd4] sm:$0xf]
        %v571 = vld [vmem:[%s1 + $0xd8] sm:$0xf]
        %v572 = vld [vmem:[%s1 + $0xdc] sm:$0xf]
        %v573 = vld [vmem:[%s1 + $0xe0] sm:$0xf]
        %v574 = vld [vmem:[%s1 + $0xe4] sm:$0xf]
        %v575 = vld [vmem:[%s1 + $0xe8] sm:$0xf]
        %v576 = vld [vmem:[%s1 + $0xec] sm:$0xf]
        %v577 = vld [vmem:[%s1 + $0xf0] sm:$0xf]
        %v578 = vld [vmem:[%s1 + $0xf4] sm:$0xf]
        %v579 = vld [vmem:[%s1 + $0xf8] sm:$0xf]
        %v580 = vld [vmem:[%s1 + $0xfc] sm:$0xf]
        %v645 = vunpack.c.l.b16 %v517
        %v646 = vunpack.c.l.b16 %v518
        %v647 = vunpack.c.l.b16 %v519
        %v648 = vunpack.c.l.b16 %v520
        %v649 = vunpack.c.l.b16 %v521
        %v650 = vunpack.c.l.b16 %v522
        %v651 = vunpack.c.l.b16 %v523
        %v652 = vunpack.c.l.b16 %v524
        %v653 = vunpack.c.l.b16 %v525
        %v654 = vunpack.c.l.b16 %v526
        %v655 = vunpack.c.l.b16 %v527
        %v656 = vunpack.c.l.b16 %v528
        %v657 = vunpack.c.l.b16 %v529
        %v658 = vunpack.c.l.b16 %v530
        %v659 = vunpack.c.l.b16 %v531
        %v660 = vunpack.c.l.b16 %v532
        %v661 = vunpack.c.l.b16 %v533
        %v662 = vunpack.c.l.b16 %v534
        %v663 = vunpack.c.l.b16 %v535
        %v664 = vunpack.c.l.b16 %v536
        %v665 = vunpack.c.l.b16 %v537
        %v666 = vunpack.c.l.b16 %v538
        %v667 = vunpack.c.l.b16 %v539
        %v668 = vunpack.c.l.b16 %v540
        %v669 = vunpack.c.l.b16 %v541
        %v670 = vunpack.c.l.b16 %v542
        %v671 = vunpack.c.l.b16 %v543
        %v672 = vunpack.c.l.b16 %v544
        %v673 = vunpack.c.l.b16 %v545
        %v674 = vunpack.c.l.b16 %v546
        %v675 = vunpack.c.l.b16 %v547
        %v676 = vunpack.c.l.b16 %v548
        %v677 = vunpack.c.l.b16 %v549
        %v678 = vunpack.c.l.b16 %v550
        %v679 = vunpack.c.l.b16 %v551
        %v680 = vunpack.c.l.b16 %v552
        %v681 = vunpack.c.l.b16 %v553
        %v682 = vunpack.c.l.b16 %v554
        %v683 = vunpack.c.l.b16 %v555
        %v684 = vunpack.c.l.b16 %v556
        %v685 = vunpack.c.l.b16 %v557
        %v686 = vunpack.c.l.b16 %v558
        %v687 = vunpack.c.l.b16 %v559
        %v688 = vunpack.c.l.b16 %v560
        %v689 = vunpack.c.l.b16 %v561
        %v690 = vunpack.c.l.b16 %v562
        %v691 = vunpack.c.l.b16 %v563
        %v692 = vunpack.c.l.b16 %v564
        %v693 = vunpack.c.l.b16 %v565
        %v694 = vunpack.c.l.b16 %v566
        %v695 = vunpack.c.l.b16 %v567
        %v696 = vunpack.c.l.b16 %v568
        %v697 = vunpack.c.l.b16 %v569
        %v698 = vunpack.c.l.b16 %v570
        %v699 = vunpack.c.l.b16 %v571
        %v700 = vunpack.c.l.b16 %v572
        %v701 = vunpack.c.l.b16 %v573
        %v702 = vunpack.c.l.b16 %v574
        %v703 = vunpack.c.l.b16 %v575
        %v704 = vunpack.c.l.b16 %v576
        %v705 = vunpack.c.l.b16 %v577
        %v706 = vunpack.c.l.b16 %v578
        %v707 = vunpack.c.l.b16 %v579
        %v708 = vunpack.c.l.b16 %v580
        %v709 = vpack.c.b16 %v646, %v645
        %v710 = vpack.c.b16 %v648, %v647
        %v711 = vpack.c.b16 %v650, %v649
        %v712 = vpack.c.b16 %v652, %v651
        %v713 = vpack.c.b16 %v654, %v653
        %v714 = vpack.c.b16 %v656, %v655
        %v715 = vpack.c.b16 %v658, %v657
        %v716 = vpack.c.b16 %v660, %v659
        %v717 = vpack.c.b16 %v662, %v661
        %v718 = vpack.c.b16 %v664, %v663
        %v719 = vpack.c.b16 %v666, %v665
        %v720 = vpack.c.b16 %v668, %v667
        %v721 = vpack.c.b16 %v670, %v669
        %v722 = vpack.c.b16 %v672, %v671
        %v723 = vpack.c.b16 %v674, %v673
        %v724 = vpack.c.b16 %v676, %v675
        %v725 = vpack.c.b16 %v678, %v677
        %v726 = vpack.c.b16 %v680, %v679
        %v727 = vpack.c.b16 %v682, %v681
        %v728 = vpack.c.b16 %v684, %v683
        %v729 = vpack.c.b16 %v686, %v685
        %v730 = vpack.c.b16 %v688, %v687
        %v731 = vpack.c.b16 %v690, %v689
        %v732 = vpack.c.b16 %v692, %v691
        %v733 = vpack.c.b16 %v694, %v693
        %v734 = vpack.c.b16 %v696, %v695
        %v735 = vpack.c.b16 %v698, %v697
        %v736 = vpack.c.b16 %v700, %v699
        %v737 = vpack.c.b16 %v702, %v701
        %v738 = vpack.c.b16 %v704, %v703
        %v739 = vpack.c.b16 %v706, %v705
        %v740 = vpack.c.b16 %v708, %v707
        %773 = vmatprep.subr.bf16.mxu0 0
        %774 = vmatpush1.bf16.msra.mxu0 %v709
        %775 = vmatprep.subr.bf16.mxu0 0
        %776 = vmatpush1.bf16.msra.mxu0 %v710
        %777 = vmatprep.subr.bf16.mxu0 0
        %778 = vmatpush1.bf16.msra.mxu0 %v711
        %779 = vmatprep.subr.bf16.mxu0 0
        %780 = vmatpush1.bf16.msra.mxu0 %v712
        %781 = vmatprep.subr.bf16.mxu0 0
        %782 = vmatpush1.bf16.msra.mxu0 %v713
        %783 = vmatprep.subr.bf16.mxu0 0
        %784 = vmatpush1.bf16.msra.mxu0 %v714
        %785 = vmatprep.subr.bf16.mxu0 0
        %786 = vmatpush1.bf16.msra.mxu0 %v715
        %787 = vmatprep.subr.bf16.mxu0 0
        %788 = vmatpush1.bf16.msra.mxu0 %v716
        %789 = vmatprep.subr.bf16.mxu0 0
        %790 = vmatpush1.bf16.msra.mxu0 %v717
        %791 = vmatprep.subr.bf16.mxu0 0
        %792 = vmatpush1.bf16.msra.mxu0 %v718
        %793 = vmatprep.subr.bf16.mxu0 0
        %794 = vmatpush1.bf16.msra.mxu0 %v719
        %795 = vmatprep.subr.bf16.mxu0 0
        %796 = vmatpush1.bf16.msra.mxu0 %v720
        %797 = vmatprep.subr.bf16.mxu0 0
        %798 = vmatpush1.bf16.msra.mxu0 %v721
        %799 = vmatprep.subr.bf16.mxu0 0
        %800 = vmatpush1.bf16.msra.mxu0 %v722
        %801 = vmatprep.subr.bf16.mxu0 0
        %802 = vmatpush1.bf16.msra.mxu0 %v723
        %803 = vmatprep.subr.bf16.mxu0 0
        %804 = vmatpush1.bf16.msra.mxu0 %v724
        %805 = vmatprep.mubr.bf16.mxu0 %v486
        %806 = vmatmul.mubr.bf16.gmra.mrb[0].mxu0 %v485
        %v807 = vpop.f32.mrb[0].mxu0
        %v808 = vadd.f32 0.0, %v807
        %v809 = vpop.f32.mrb[0].mxu0
        %v810 = vpop.f32.mrb[0].mxu0
        %v811 = vadd.f32 0.0, %v810
        %v812 = vpop.f32.mrb[0].mxu0
        %813 = vmatprep.mubr.bf16.mxu0 %v490
        %814 = vmatmul.mubr.bf16.gmra.mrb[0].mxu0 %v489
        %v815 = vpop.f32.mrb[0].mxu0
        %v816 = vadd.f32 0.0, %v815
        %v817 = vpop.f32.mrb[0].mxu0
        %v818 = vpop.f32.mrb[0].mxu0
        %v819 = vadd.f32 0.0, %v818
        %v820 = vpop.f32.mrb[0].mxu0
        %821 = vmatprep.mubr.bf16.mxu0 %v494
        %822 = vmatmul.mubr.bf16.gmra.mrb[0].mxu0 %v493
        %v823 = vpop.f32.mrb[0].mxu0
        %v824 = vadd.f32 0.0, %v823
        %v825 = vpop.f32.mrb[0].mxu0
        %v826 = vpop.f32.mrb[0].mxu0
        %v827 = vadd.f32 0.0, %v826
        %v828 = vpop.f32.mrb[0].mxu0
        %829 = vmatprep.mubr.bf16.mxu0 %v498
        %830 = vmatmul.mubr.bf16.gmra.mrb[0].mxu0 %v497
        %v831 = vpop.f32.mrb[0].mxu0
        %v832 = vadd.f32 0.0, %v831
        %v833 = vpop.f32.mrb[0].mxu0
        %v834 = vpop.f32.mrb[0].mxu0
        %v835 = vadd.f32 0.0, %v834
        %v836 = vpop.f32.mrb[0].mxu0
        %837 = vmatprep.mubr.bf16.mxu0 %v502
        %838 = vmatmul.mubr.bf16.gmra.mrb[0].mxu0 %v501
        %v839 = vpop.f32.mrb[0].mxu0
        %v840 = vadd.f32 0.0, %v839
        %v841 = vpop.f32.mrb[0].mxu0
        %v842 = vpop.f32.mrb[0].mxu0
        %v843 = vadd.f32 0.0, %v842
        %v844 = vpop.f32.mrb[0].mxu0
        %845 = vmatprep.mubr.bf16.mxu0 %v506
        %846 = vmatmul.mubr.bf16.gmra.mrb[0].mxu0 %v505
        %v847 = vpop.f32.mrb[0].mxu0
        %v848 = vadd.f32 0.0, %v847
        %v849 = vpop.f32.mrb[0].mxu0
        %v850 = vpop.f32.mrb[0].mxu0
        %v851 = vadd.f32 0.0, %v850
        %v852 = vpop.f32.mrb[0].mxu0
        %853 = vmatprep.mubr.bf16.mxu0 %v510
        %854 = vmatmul.mubr.bf16.gmra.mrb[0].mxu0 %v509
        %v855 = vpop.f32.mrb[0].mxu0
        %v856 = vadd.f32 0.0, %v855
        %v857 = vpop.f32.mrb[0].mxu0
        %v858 = vpop.f32.mrb[0].mxu0
        %v859 = vadd.f32 0.0, %v858
        %v860 = vpop.f32.mrb[0].mxu0
        %861 = vmatprep.mubr.bf16.mxu0 %v514
        %862 = vmatmul.mubr.bf16.gmra.mrb[0].mxu0 %v513
        %v863 = vpop.f32.mrb[0].mxu0
        %v864 = vadd.f32 0.0, %v863
        %v865 = vpop.f32.mrb[0].mxu0
        %v866 = vpop.f32.mrb[0].mxu0
        %v867 = vadd.f32 0.0, %v866
        %v868 = vpop.f32.mrb[0].mxu0
        %869 = vdwg.mxu0
        %870 = vmatprep.subr.bf16.mxu0 0
        %871 = vmatpush1.bf16.msra.mxu0 %v725
        %872 = vmatprep.subr.bf16.mxu0 0
        %873 = vmatpush1.bf16.msra.mxu0 %v726
        %874 = vmatprep.subr.bf16.mxu0 0
        %875 = vmatpush1.bf16.msra.mxu0 %v727
        %876 = vmatprep.subr.bf16.mxu0 0
        %877 = vmatpush1.bf16.msra.mxu0 %v728
        %878 = vmatprep.subr.bf16.mxu0 0
        %879 = vmatpush1.bf16.msra.mxu0 %v729
        %880 = vmatprep.subr.bf16.mxu0 0
        %881 = vmatpush1.bf16.msra.mxu0 %v730
        %882 = vmatprep.subr.bf16.mxu0 0
        %883 = vmatpush1.bf16.msra.mxu0 %v731
        %884 = vmatprep.subr.bf16.mxu0 0
        %885 = vmatpush1.bf16.msra.mxu0 %v732
        %886 = vmatprep.subr.bf16.mxu0 0
        %887 = vmatpush1.bf16.msra.mxu0 %v733
        %888 = vmatprep.subr.bf16.mxu0 0
        %889 = vmatpush1.bf16.msra.mxu0 %v734
        %890 = vmatprep.subr.bf16.mxu0 0
        %891 = vmatpush1.bf16.msra.mxu0 %v735
        %892 = vmatprep.subr.bf16.mxu0 0
        %893 = vmatpush1.bf16.msra.mxu0 %v736
        %894 = vmatprep.subr.bf16.mxu0 0
        %895 = vmatpush1.bf16.msra.mxu0 %v737
        %896 = vmatprep.subr.bf16.mxu0 0
        %897 = vmatpush1.bf16.msra.mxu0 %v738
        %898 = vmatprep.subr.bf16.mxu0 0
        %899 = vmatpush1.bf16.msra.mxu0 %v739
        %900 = vmatprep.subr.bf16.mxu0 0
        %901 = vmatpush1.bf16.msra.mxu0 %v740
        %902 = vmatprep.mubr.bf16.mxu0 %v488
        %903 = vmatmul.mubr.bf16.gmra.mrb[0].mxu0 %v487
        %v904 = vpop.f32.mrb[0].mxu0
        %v905 = vadd.f32 %v808, %v904
        %v906 = vpop.f32.mrb[0].mxu0
        %v907 = vpop.f32.mrb[0].mxu0
        %v908 = vadd.f32 %v811, %v907
        %v909 = vpop.f32.mrb[0].mxu0
        %910 = vmatprep.mubr.bf16.mxu0 %v492
        %911 = vmatmul.mubr.bf16.gmra.mrb[0].mxu0 %v491
        %v912 = vpop.f32.mrb[0].mxu0
        %v913 = vadd.f32 %v816, %v912
        %v914 = vpop.f32.mrb[0].mxu0
        %v915 = vpop.f32.mrb[0].mxu0
        %v916 = vadd.f32 %v819, %v915
        %v917 = vpop.f32.mrb[0].mxu0
        %918 = vmatprep.mubr.bf16.mxu0 %v496
        %919 = vmatmul.mubr.bf16.gmra.mrb[0].mxu0 %v495
        %v920 = vpop.f32.mrb[0].mxu0
        %v921 = vadd.f32 %v824, %v920
        %v922 = vpop.f32.mrb[0].mxu0
        %v923 = vpop.f32.mrb[0].mxu0
        %v924 = vadd.f32 %v827, %v923
        %v925 = vpop.f32.mrb[0].mxu0
        %926 = vmatprep.mubr.bf16.mxu0 %v500
        %927 = vmatmul.mubr.bf16.gmra.mrb[0].mxu0 %v499
        %v928 = vpop.f32.mrb[0].mxu0
        %v929 = vadd.f32 %v832, %v928
        %v930 = vpop.f32.mrb[0].mxu0
        %v931 = vpop.f32.mrb[0].mxu0
        %v932 = vadd.f32 %v835, %v931
        %v933 = vpop.f32.mrb[0].mxu0
        %934 = vmatprep.mubr.bf16.mxu0 %v504
        %935 = vmatmul.mubr.bf16.gmra.mrb[0].mxu0 %v503
        %v936 = vpop.f32.mrb[0].mxu0
        %v937 = vadd.f32 %v840, %v936
        %v938 = vpop.f32.mrb[0].mxu0
        %v939 = vpop.f32.mrb[0].mxu0
        %v940 = vadd.f32 %v843, %v939
        %v941 = vpop.f32.mrb[0].mxu0
        %942 = vmatprep.mubr.bf16.mxu0 %v508
        %943 = vmatmul.mubr.bf16.gmra.mrb[0].mxu0 %v507
        %v944 = vpop.f32.mrb[0].mxu0
        %v945 = vadd.f32 %v848, %v944
        %v946 = vpop.f32.mrb[0].mxu0
        %v947 = vpop.f32.mrb[0].mxu0
        %v948 = vadd.f32 %v851, %v947
        %v949 = vpop.f32.mrb[0].mxu0
        %950 = vmatprep.mubr.bf16.mxu0 %v512
        %951 = vmatmul.mubr.bf16.gmra.mrb[0].mxu0 %v511
        %v952 = vpop.f32.mrb[0].mxu0
        %v953 = vadd.f32 %v856, %v952
        %v954 = vpop.f32.mrb[0].mxu0
        %v955 = vpop.f32.mrb[0].mxu0
        %v956 = vadd.f32 %v859, %v955
        %v957 = vpop.f32.mrb[0].mxu0
        %958 = vmatprep.mubr.bf16.mxu0 %v516
        %959 = vmatmul.mubr.bf16.gmra.mrb[0].mxu0 %v515
        %v960 = vpop.f32.mrb[0].mxu0
        %v961 = vadd.f32 %v864, %v960
        %v962 = vpop.f32.mrb[0].mxu0
        %v963 = vpop.f32.mrb[0].mxu0
        %v964 = vadd.f32 %v867, %v963
        %v965 = vpop.f32.mrb[0].mxu0
        %966 = vdwg.mxu0
        %p967 = scmp.eq.s32.totalorder %s23, 0
        // Predicated region
        $region37: #{tpu_custom_call.1} parent=35 // pred_check
          %p968 = pneg %p967
        $region38: #{tpu_custom_call.1} parent=35 // pred_check_branch
          %970 = sbr.rel (%p968) target = $region40
        $region39: #{tpu_custom_call.1} parent=35 // pred_region
          %vm971 = vcmask 253952
          %972 = vst.msk [vmem:[#allocation2] sm:$0x1] %vm971, 0.0
          %973 = vst.msk [vmem:[#allocation3] sm:$0x1] %vm971, %v905
        $region40: #{tpu_custom_call.1} parent=35 // pred_fallthru
          _
        %v974 = vld [vmem:[#allocation2] sm:$0x1]
        %vm975 = vcmask 261120
        %v976 = vsel %vm975, %v905, 0.0
        %v977 = vsel %vm975, %v908, 0.0
        %v978 = vadd.f32 %v976, %v977
        %v979 = vsel %vm975, %v913, 0.0
        %v980 = vadd.f32 %v978, %v979
        %v981 = vsel %vm975, %v916, 0.0
        %v982 = vadd.f32 %v980, %v981
        %v983 = vsel %vm975, %v921, 0.0
        %v984 = vadd.f32 %v982, %v983
        %v985 = vsel %vm975, %v924, 0.0
        %v986 = vadd.f32 %v984, %v985
        %v987 = vsel %vm975, %v929, 0.0
        %v988 = vadd.f32 %v986, %v987
        %v989 = vsel %vm975, %v932, 0.0
        %v990 = vadd.f32 %v988, %v989
        %v991 = vsel %vm975, %v937, 0.0
        %v992 = vadd.f32 %v990, %v991
        %v993 = vsel %vm975, %v940, 0.0
        %v994 = vadd.f32 %v992, %v993
        %v995 = vsel %vm975, %v945, 0.0
        %v996 = vadd.f32 %v994, %v995
        %v997 = vsel %vm975, %v948, 0.0
        %v998 = vadd.f32 %v996, %v997
        %v999 = vsel %vm975, %v953, 0.0
        %v1000 = vadd.f32 %v998, %v999
        %v1001 = vsel %vm975, %v956, 0.0
        %v1002 = vadd.f32 %v1000, %v1001
        %v1003 = vsel %vm975, %v961, 0.0
        %v1004 = vadd.f32 %v1002, %v1003
        %v1005 = vsel %vm975, %v964, 0.0
        %v1006 = vadd.f32 %v1004, %v1005
        %v1007 = vrot.slane %v1006, 4
        %v1008 = vadd.f32 %v1006, %v1007
        %v1009 = vrot.slane %v1008, 2
        %v1010 = vadd.f32 %v1008, %v1009
        %v1011 = vrot.slane %v1010, 1
        %v1012 = vadd.f32 %v1010, %v1011
        %v1013 = vadd.f32 %v974, %v1012
        %vm1014 = vcmask 253952
        %1015 = vst.msk [vmem:[#allocation2] sm:$0x1] %vm1014, %v1013
        %p1016 = scmp.eq.s32.totalorder %s23, 1
        // Predicated region
        $region41: #{tpu_custom_call.1} parent=35 // pred_check
          %p1017 = pneg %p1016
        $region42: #{tpu_custom_call.1} parent=35 // pred_check_branch
          %1019 = sbr.rel (%p1017) target = $region44
        $region43: #{tpu_custom_call.1} parent=35 // pred_region
          %v1020 = vld [vmem:[#allocation2] sm:$0x1]
          %v1022 = vcombine.high %v964, %v964
          %v1024 = vunpack.c.l.s4 1966171168
          %v1025 = vunpack.c.0.s8 %v1024
          %v1026 = vlaneseq
          %v1027 = vshrl.u32 %v1026, 7
          %v1028 = vsub.s32 %v1025, %v1027
          %v1029 = vrot.slane %v1022, %v1028
          %v1030 = vcombine.high %v1029, %v1029
          %v1032 = vunpack.c.l.s4 1966171168
          %v1033 = vunpack.c.0.s8 %v1032
          %v1034 = vlaneseq
          %v1035 = vshrl.u32 %v1034, 7
          %v1036 = vsub.s32 %v1033, %v1035
          %v1037 = vrot.slane %v1030, %v1036
          %v1038 = vcombine.high %v1037, %v1037
          %v1040 = vsub.f32 %v1020, %v1038
          %v1041 = vld [vmem:[#allocation3] sm:$0x1]
          %v1042 = vsub.f32 %v1020, %v1041
          %v1044 = vlaneseq
          %v1045 = vshrl.u32 %v1044, 7
          %v1046 = vsub.s32 0, %v1045
          %v1047 = vrot.slane %v1020, %v1046
          %1048 = vrot.lane.b32.xlu0 %v1047, 32
          %v1049 = vpop.permute.xlu0 %1048
          %v1052 = vlaneseq
          %v1053 = vshrl.u32 %v1052, 7
          %v1054 = vsub.s32 0, %v1053
          %v1055 = vrot.slane %v1042, %v1054
          %1056 = vrot.lane.b32.xlu0 %v1055, 64
          %v1057 = vpop.permute.xlu0 %1056
          %v1059 = vsel %vm975, %v1040, %v1049
          %vm1060 = vcmask 523264
          %v1061 = vsel %vm1060, %v1059, %v1057
          %v1062 = vld [vmem:[%s2] sm:$0xff]
          %v1063 = vld [vmem:[%s2 + $0x8] sm:$0xff]
          %v1064 = vld [vmem:[%s2 + $0x10] sm:$0xff]
          %v1065 = vld [vmem:[%s2 + $0x18] sm:$0xff]
          %v1066 = vld [vmem:[%s2 + $0x20] sm:$0xff]
          %v1067 = vld [vmem:[%s2 + $0x28] sm:$0xff]
          %v1068 = vld [vmem:[%s2 + $0x30] sm:$0xff]
          %v1069 = vld [vmem:[%s2 + $0x38] sm:$0xff]
          %v1070 = vld [vmem:[%s2 + $0x40] sm:$0xff]
          %v1071 = vld [vmem:[%s2 + $0x48] sm:$0xff]
          %v1072 = vld [vmem:[%s2 + $0x50] sm:$0xff]
          %v1073 = vld [vmem:[%s2 + $0x58] sm:$0xff]
          %v1074 = vld [vmem:[%s3] sm:$0x1]
          %vm1075 = vcmask 785408
          %v1077 = vsel %vm1075, %v1061, 0
          %1079 = vmatprep.subr.mxu0 0.0
          %1080 = vmatpush1.msra.mxu0 %v1062
          %1081 = vmatprep.subr.mxu0 0.0
          %1082 = vmatpush1.msra.mxu0 %v1063
          %1083 = vmatprep.subr.mxu0 0.0
          %1084 = vmatpush1.msra.mxu0 %v1064
          %1085 = vmatprep.subr.mxu0 0.0
          %1086 = vmatpush1.msra.mxu0 %v1065
          %1087 = vmatprep.subr.mxu0 0.0
          %1088 = vmatpush1.msra.mxu0 %v1066
          %1089 = vmatprep.subr.mxu0 0.0
          %1090 = vmatpush1.msra.mxu0 %v1067
          %1091 = vmatprep.subr.mxu0 0.0
          %1092 = vmatpush1.msra.mxu0 %v1068
          %1093 = vmatprep.subr.mxu0 0.0
          %1094 = vmatpush1.msra.mxu0 %v1069
          %1095 = vmatprep.subr.mxu0 0.0
          %1096 = vmatpush1.msra.mxu0 %v1070
          %1097 = vmatprep.subr.mxu0 0.0
          %1098 = vmatpush1.msra.mxu0 %v1071
          %1099 = vmatprep.subr.mxu0 0.0
          %1100 = vmatpush1.msra.mxu0 %v1072
          %1101 = vmatprep.subr.mxu0 0.0
          %1102 = vmatpush1.msra.mxu0 %v1073
          %1103 = vmatprep.subr.mxu0 0.0
          %1104 = vmatpush1.msra.mxu0 0.0
          %1105 = vmatprep.subr.mxu0 0.0
          %1106 = vmatpush1.msra.mxu0 0.0
          %1107 = vmatprep.subr.mxu0 0.0
          %1108 = vmatpush1.msra.mxu0 0.0
          %1109 = vmatprep.subr.mxu0 0.0
          %1110 = vmatpush1.msra.mxu0 0.0
          %1111 = vmatprep.subr.mxu0 0.0
          %1112 = vmatpush1.msra.mxu0 0.0
          %1113 = vmatprep.subr.mxu0 0.0
          %1114 = vmatpush1.msra.mxu0 0.0
          %1115 = vmatprep.subr.mxu0 0.0
          %1116 = vmatpush1.msra.mxu0 0.0
          %1117 = vmatprep.subr.mxu0 0.0
          %1118 = vmatpush1.msra.mxu0 0.0
          %1119 = vmatprep.subr.mxu0 0.0
          %1120 = vmatpush1.msra.mxu0 0.0
          %1121 = vmatprep.subr.mxu0 0.0
          %1122 = vmatpush1.msra.mxu0 0.0
          %1123 = vmatprep.subr.mxu0 0.0
          %1124 = vmatpush1.msra.mxu0 0.0
          %1125 = vmatprep.subr.mxu0 0.0
          %1126 = vmatpush1.msra.mxu0 0.0
          %1127 = vmatprep.subr.mxu0 0.0
          %1128 = vmatpush1.msra.mxu0 0.0
          %1129 = vmatprep.subr.mxu0 0.0
          %1130 = vmatpush1.msra.mxu0 0.0
          %1131 = vmatprep.subr.mxu0 0.0
          %1132 = vmatpush1.msra.mxu0 0.0
          %1133 = vmatprep.subr.mxu0 0.0
          %1134 = vmatpush1.msra.mxu0 0.0
          %1135 = vmatprep.subr.mxu0 0.0
          %1136 = vmatpush1.msra.mxu0 0.0
          %1137 = vmatprep.subr.mxu0 0.0
          %1138 = vmatpush1.msra.mxu0 0.0
          %1139 = vmatprep.subr.mxu0 0.0
          %1140 = vmatpush1.msra.mxu0 0.0
          %1141 = vmatprep.subr.mxu0 0.0
          %1142 = vmatpush1.msra.mxu0 0.0
          %1143 = vmatprep.mubr.f32.mxu0 0.0
          %1144 = vmatmul.mubr.f32.gmra.mrb[0].mxu0 %v1077
          %v1145 = vpop.f32.mrb[0].mxu0
          %v1146 = vadd.f32 %v1074, %v1145
          %v1147 = vpop.f32.mrb[0].mxu0
          %1148 = vdwg.mxu0
          %v1149 = vxor.u32 %v1146, 2147483648
          %v1150 = vmul.f32 %v1149, 1.442695
          %v1151 = vpow.pop %v1150
          %v1152 = vadd.f32 %v1151, 1.0
          %v1153 = vrcp.pop %v1152
          %v1154 = vmul.f32 1.0, %v1153
          %1155 = vst [vmem:[%s212] sm:$0x1] %v1154
        $region44: #{tpu_custom_call.1} parent=35 // pred_fallthru
          _
        %s1156 = sand.u32 %s129, 1
        %s1157 = scalar_lea.sflag [#allocation5], %s1156
        %s1158 = sand.u32 %s129, 1
        %s1159 = scalar_lea.vmem [#allocation4], %s1158
        // Predicated region
        $region45: #{tpu_custom_call.1} parent=35 // pred_check
          %p1160 = pneg %p139
        $region46: #{tpu_custom_call.1} parent=35 // pred_check_branch
          %1162 = sbr.rel (%p1160) target = $region48
        $region47: #{tpu_custom_call.1} parent=35 // pred_region
          %s1164 = ssub.s32 16, 16
          %1165 = vsyncadd %s1157, %s1164
          %s1166 = smul.addr %s22, 16
          %s1167 = scalar_lea.hbm %s4, %s1166
          %s1169 = sshll.u32 %s1159, 4
          %s1170 = int_to_ptr.vmem [resolvable:$true] %s1169
          %1172 = dma.vmem_to_hbm [thread:$0]  %s1170, 16, %s1167, %s1157
        $region48: #{tpu_custom_call.1} parent=35 // pred_fallthru
          _
      $region36: #{tpu_custom_call.1} parent=5 // pred_fallthru
        _
      %p1173 = scmp.le.s32.totalorder 2, %s13
      // Predicated region
      $region49: #{tpu_custom_call.1} parent=5 // pred_check
        %p1174 = pneg %p1173
      $region50: #{tpu_custom_call.1} parent=5 // pred_check_branch
        %1176 = sbr.rel (%p1174) target = $region52
      $region51: #{tpu_custom_call.1} parent=5 // pred_region
        %s1177 = ssub.s32 %s13, 2
        // Predicated region
        $region53: #{tpu_custom_call.1} parent=51 // pred_check
          %p1178 = pneg %p145
        $region54: #{tpu_custom_call.1} parent=51 // pred_check_branch
          %1180 = sbr.rel (%p1178) target = $region56
        $region55: #{tpu_custom_call.1} parent=51 // pred_region
          %s1181 = sand.u32 %s130, 1
          %s1182 = scalar_lea.sflag [#allocation5], %s1181
          %s1183 = sand.u32 %s130, 1
          %s1184 = scalar_lea.vmem [#allocation4], %s1183
          %1185 = dma.done %s1182, 16
        $region56: #{tpu_custom_call.1} parent=51 // pred_fallthru
          _
      $region52: #{tpu_custom_call.1} parent=5 // pred_fallthru
        _
    $region6: #{tpu_custom_call.1} parent=1 // loop_footer
      %s17 = sadd.s32 1, %s13
    $region7: #{tpu_custom_call.1} parent=1 // loop_footer_branch
      %12 = sbr.rel target = $region3
    $region8: #{tpu_custom_call.1} parent=1 // loop_exit
      _
    %1186 = vsyncpa [#allocation5], 1
    %s1187 = scalar_lea.sflag [#allocation5], 1
    %1188 = vsyncpa %s1187, 1

</llo_original>
